<compile_context>
chip_gen: v7x
topology: tpu7x:2x2x1
jax: 0.10.0
libtpu: 0.0.40
codegen_flags: <defaults>
</compile_context>

<pallas_src>
import functools

import jax
import jax.numpy as jnp
from jax.experimental import pallas as pl
from jax.experimental.pallas import tpu as pltpu

_TB_MAX = 32768   # max batch-tile (lane) width for the gridded path
_SMALL_B = 1024   # at or below this, use a single un-gridded block


def _policy_net_kernel(x_ref, p_ref, out_ref):
    # x_ref:   (4, L)  feature-major input tile (L batch lanes)
    # p_ref:   (24, 8) packed params: [:,0:4]=W1^T, [:,4]=b1,
    #                                 [:,5]=w2[:,1]-w2[:,0], [0,6]=b2[1]-b2[0]
    # out_ref: (2, L)  row 0 = p(action 0), row 1 = p(action 1)
    xt = x_ref[...]                              # (4, L) f32
    params = p_ref[...]                          # (24, 8)
    L = xt.shape[1]

    bdiff = params[0:1, 6:7]                     # (1, 1)
    d = jnp.broadcast_to(bdiff, (1, L))          # logit-diff accumulator

    # fc1 + ReLU + weighted reduction, 3 chunks of 8 hidden units (8 sublanes
    # each = one full vreg row group) so the live intermediate stays (8, L).
    for c in range(3):
        r0 = c * 8
        w1t = params[r0:r0 + 8, 0:4]             # (8, 4)
        b1 = params[r0:r0 + 8, 4:5]              # (8, 1)
        wd = params[r0:r0 + 8, 5:6]              # (8, 1)
        h = b1 + w1t[:, 0:1] * xt[0:1, :]
        h = h + w1t[:, 1:2] * xt[1:2, :]
        h = h + w1t[:, 2:3] * xt[2:3, :]
        h = h + w1t[:, 3:4] * xt[3:4, :]
        h = jnp.maximum(h, 0.0)                  # (8, L)
        d = d + jnp.sum(wd * h, axis=0, keepdims=True)

    # 2-class softmax == sigmoid of the logit difference (exact rewrite).
    p0 = 1.0 / (1.0 + jnp.exp(d))                # (1, L)
    out_ref[...] = jnp.concatenate([p0, 1.0 - p0], axis=0)   # one store


def _pack_params(w1, b1, w2, b2):
    """Pack all parameters into one (24, 8) f32 slab -> a single DMA."""
    slab = jnp.zeros((24, 8), jnp.float32)
    slab = slab.at[:, 0:4].set(w1.T.astype(jnp.float32))                  # W1^T
    slab = slab.at[:, 4].set(b1.astype(jnp.float32))                      # b1
    slab = slab.at[:, 5].set((w2[:, 1] - w2[:, 0]).astype(jnp.float32))   # w-diff
    slab = slab.at[0, 6].set((b2[1] - b2[0]).astype(jnp.float32))         # b-diff
    return slab


def _round_up(n, m):
    return ((n + m - 1) // m) * m


def _policy_pallas_feature_major(x_t, slab):
    """x_t: (4, B) f32 (feature-major) -> (2, B) f32 probabilities."""
    B = x_t.shape[1]

    if B <= _SMALL_B:
        # ---- small batch: single block, no grid, no pipeline machinery ----
        Bp = _round_up(B, 128)
        x_pad = jnp.zeros((4, Bp), jnp.float32).at[:, :B].set(
            x_t.astype(jnp.float32))
        out_t = pl.pallas_call(
            _policy_net_kernel,
            out_shape=jax.ShapeDtypeStruct((2, Bp), jnp.float32),
            in_specs=[
                pl.BlockSpec(memory_space=pltpu.MemorySpace.VMEM),
                pl.BlockSpec(memory_space=pltpu.MemorySpace.VMEM),
            ],
            out_specs=pl.BlockSpec(memory_space=pltpu.MemorySpace.VMEM),
        )(x_pad, slab)
        return out_t[:, :B]

    # ---- large batch: tile the batch (lane) axis, parallel grid -----------
    # Tile up to 32K lanes (amortizes ~0.35us/step pipeline overhead) but
    # always >= 2 tiles so both v7x TensorCores get work; multiple of 512.
    B512 = _round_up(B, 512)
    tb = min(_TB_MAX, _round_up(max(512, B512 // 2), 512))
    Bp = _round_up(B, tb)
    x_pad = jnp.zeros((4, Bp), jnp.float32).at[:, :B].set(
        x_t.astype(jnp.float32))
    out_t = pl.pallas_call(
        _policy_net_kernel,
        out_shape=jax.ShapeDtypeStruct((2, Bp), jnp.float32),
        grid=(Bp // tb,),
        in_specs=[
            pl.BlockSpec((4, tb), lambda i: (0, i)),
            pl.BlockSpec((24, 8), lambda i: (0, 0)),
        ],
        out_specs=pl.BlockSpec((2, tb), lambda i: (0, i)),
        compiler_params=pltpu.CompilerParams(
            dimension_semantics=("parallel",),
            vmem_limit_bytes=32 * 1024 * 1024,   # safe on v5e's 16MiB default
        ),
    )(x_pad, slab)
    return out_t[:, :B]


@functools.partial(jax.jit)
def policy_network_forward_feature_major(x_t, w1, b1, w2, b2):
    """Feature-major API: x_t (4, B) -> (2, B).  No wrapper transposes;
    use this when the producer/consumer can stay feature-major."""
    return _policy_pallas_feature_major(x_t, _pack_params(w1, b1, w2, b2))


@functools.partial(jax.jit)
def policy_network_forward(x, w1, b1, w2, b2):
    """PyTorch-layout API: x (B, 4) float32 -> policy distribution (B, 2)."""
    slab = _pack_params(w1, b1, w2, b2)
    out_t = _policy_pallas_feature_major(x.T, slab)
    return out_t.T


def init_params(key):
    """Deterministic init mirroring nn.Linear's U(-1/sqrt(fan_in), 1/sqrt(fan_in))."""
    k1, k2, k3, k4 = jax.random.split(key, 4)
    bound1 = 1.0 / jnp.sqrt(4.0)
    bound2 = 1.0 / jnp.sqrt(24.0)
    # stored as (in_features, out_features)
    w1 = jax.random.uniform(k1, (4, 24), jnp.float32, -bound1, bound1)
    b1 = jax.random.uniform(k2, (24,), jnp.float32, -bound1, bound1)
    w2 = jax.random.uniform(k3, (24, 2), jnp.float32, -bound2, bound2)
    b2 = jax.random.uniform(k4, (2,), jnp.float32, -bound2, bound2)
    return w1, b1, w2, b2


def _reference(x, w1, b1, w2, b2):
    hp = jax.lax.Precision.HIGHEST
    h = jnp.maximum(jnp.dot(x, w1, precision=hp) + b1, 0.0)
    logits = jnp.dot(h, w2, precision=hp) + b2
    return jax.nn.softmax(logits, axis=-1)


if __name__ == "__main__":
    key = jax.random.PRNGKey(0)
    k_params, k_x = jax.random.split(key)
    w1, b1, w2, b2 = init_params(k_params)

    # CartPole-style state input: batch of 8 observations of dim 4
    x = jax.random.normal(k_x, (8, 4), jnp.float32)
    policy = jax.block_until_ready(policy_network_forward(x, w1, b1, w2, b2))

    ref = _reference(x, w1, b1, w2, b2)
    assert policy.shape == (8, 2)
    assert jnp.allclose(policy, ref, atol=1e-5, rtol=1e-5)
    assert jnp.allclose(jnp.sum(policy, axis=-1), 1.0, atol=1e-5)

    # Feature-major path (no wrapper transposes) must match too.
    policy_fm = jax.block_until_ready(
        policy_network_forward_feature_major(x.T, w1, b1, w2, b2))
    assert policy_fm.shape == (2, 8)
    assert jnp.allclose(policy_fm.T, ref, atol=1e-5, rtol=1e-5)

    # Exercise the tiled (grid) path: batched-rollout sized input.
    # B=1500 -> tile=1024 lanes, grid of 2 "parallel" steps (both v7x TCs busy).
    x_big = jax.random.normal(jax.random.PRNGKey(1), (1500, 4), jnp.float32)
    policy_big = jax.block_until_ready(
        policy_network_forward(x_big, w1, b1, w2, b2))
    ref_big = _reference(x_big, w1, b1, w2, b2)
    assert policy_big.shape == (1500, 2)
    assert jnp.allclose(policy_big, ref_big, atol=1e-5, rtol=1e-5)

    print("KERNEL_OK")
</pallas_src>

<mosaic_0001>
module attributes {stable_mosaic.version = 11 : i64} {
  func.func @_policy_net_kernel(%arg0: memref<4x128xf32, #tpu.memory_space<vmem>>, %arg1: memref<24x8xf32, #tpu.memory_space<vmem>>, %arg2: memref<2x128xf32, #tpu.memory_space<vmem>>) attributes {dimension_semantics = [], scalar_prefetch = 0 : i64, scratch_operands = 0 : i64, tpu.core_type = #tpu.core_type<tc>} {
    %c0 = arith.constant 0 : index
    %c0_0 = arith.constant 0 : index
    %0 = vector.load %arg0[%c0, %c0_0] : memref<4x128xf32, #tpu.memory_space<vmem>>, vector<4x128xf32>
    %c0_1 = arith.constant 0 : index
    %c0_2 = arith.constant 0 : index
    %1 = vector.load %arg1[%c0_1, %c0_2] : memref<24x8xf32, #tpu.memory_space<vmem>>, vector<24x8xf32>
    %2 = vector.extract_strided_slice %1 {offsets = [0, 6], sizes = [1, 1], strides = [1, 1]} : vector<24x8xf32> to vector<1x1xf32>
    %3 = vector.shape_cast %2 : vector<1x1xf32> to vector<1x1xf32>
    %4 = vector.broadcast %3 : vector<1x1xf32> to vector<1x128xf32>
    %5 = vector.extract_strided_slice %1 {offsets = [0, 0], sizes = [8, 4], strides = [1, 1]} : vector<24x8xf32> to vector<8x4xf32>
    %6 = vector.extract_strided_slice %1 {offsets = [0, 4], sizes = [8, 1], strides = [1, 1]} : vector<24x8xf32> to vector<8x1xf32>
    %7 = vector.extract_strided_slice %1 {offsets = [0, 5], sizes = [8, 1], strides = [1, 1]} : vector<24x8xf32> to vector<8x1xf32>
    %8 = vector.extract_strided_slice %5 {offsets = [0, 0], sizes = [8, 1], strides = [1, 1]} : vector<8x4xf32> to vector<8x1xf32>
    %9 = vector.extract_strided_slice %0 {offsets = [0, 0], sizes = [1, 128], strides = [1, 1]} : vector<4x128xf32> to vector<1x128xf32>
    %10 = vector.broadcast %8 : vector<8x1xf32> to vector<8x128xf32>
    %11 = vector.broadcast %9 : vector<1x128xf32> to vector<8x128xf32>
    %12 = arith.mulf %10, %11 : vector<8x128xf32>
    %13 = vector.broadcast %6 : vector<8x1xf32> to vector<8x128xf32>
    %14 = arith.addf %13, %12 : vector<8x128xf32>
    %15 = vector.extract_strided_slice %5 {offsets = [0, 1], sizes = [8, 1], strides = [1, 1]} : vector<8x4xf32> to vector<8x1xf32>
    %16 = vector.extract_strided_slice %0 {offsets = [1, 0], sizes = [1, 128], strides = [1, 1]} : vector<4x128xf32> to vector<1x128xf32>
    %17 = vector.broadcast %15 : vector<8x1xf32> to vector<8x128xf32>
    %18 = vector.broadcast %16 : vector<1x128xf32> to vector<8x128xf32>
    %19 = arith.mulf %17, %18 : vector<8x128xf32>
    %20 = arith.addf %14, %19 : vector<8x128xf32>
    %21 = vector.extract_strided_slice %5 {offsets = [0, 2], sizes = [8, 1], strides = [1, 1]} : vector<8x4xf32> to vector<8x1xf32>
    %22 = vector.extract_strided_slice %0 {offsets = [2, 0], sizes = [1, 128], strides = [1, 1]} : vector<4x128xf32> to vector<1x128xf32>
    %23 = vector.broadcast %21 : vector<8x1xf32> to vector<8x128xf32>
    %24 = vector.broadcast %22 : vector<1x128xf32> to vector<8x128xf32>
    %25 = arith.mulf %23, %24 : vector<8x128xf32>
    %26 = arith.addf %20, %25 : vector<8x128xf32>
    %27 = vector.extract_strided_slice %5 {offsets = [0, 3], sizes = [8, 1], strides = [1, 1]} : vector<8x4xf32> to vector<8x1xf32>
    %28 = vector.extract_strided_slice %0 {offsets = [3, 0], sizes = [1, 128], strides = [1, 1]} : vector<4x128xf32> to vector<1x128xf32>
    %29 = vector.broadcast %27 : vector<8x1xf32> to vector<8x128xf32>
    %30 = vector.broadcast %28 : vector<1x128xf32> to vector<8x128xf32>
    %31 = arith.mulf %29, %30 : vector<8x128xf32>
    %32 = arith.addf %26, %31 : vector<8x128xf32>
    %cst = arith.constant 0.000000e+00 : f32
    %33 = vector.broadcast %cst : f32 to vector<8x128xf32>
    %34 = arith.maximumf %32, %33 : vector<8x128xf32>
    %35 = vector.broadcast %7 : vector<8x1xf32> to vector<8x128xf32>
    %36 = arith.mulf %35, %34 : vector<8x128xf32>
    %cst_3 = arith.constant dense<0.000000e+00> : vector<128xf32>
    %37 = vector.multi_reduction <add>, %36, %cst_3 [0] : vector<8x128xf32> to vector<128xf32>
    %38 = vector.shape_cast %37 : vector<128xf32> to vector<1x128xf32>
    %39 = arith.addf %4, %38 : vector<1x128xf32>
    %40 = vector.extract_strided_slice %1 {offsets = [8, 0], sizes = [8, 4], strides = [1, 1]} : vector<24x8xf32> to vector<8x4xf32>
    %41 = vector.extract_strided_slice %1 {offsets = [8, 4], sizes = [8, 1], strides = [1, 1]} : vector<24x8xf32> to vector<8x1xf32>
    %42 = vector.extract_strided_slice %1 {offsets = [8, 5], sizes = [8, 1], strides = [1, 1]} : vector<24x8xf32> to vector<8x1xf32>
    %43 = vector.extract_strided_slice %40 {offsets = [0, 0], sizes = [8, 1], strides = [1, 1]} : vector<8x4xf32> to vector<8x1xf32>
    %44 = vector.extract_strided_slice %0 {offsets = [0, 0], sizes = [1, 128], strides = [1, 1]} : vector<4x128xf32> to vector<1x128xf32>
    %45 = vector.broadcast %43 : vector<8x1xf32> to vector<8x128xf32>
    %46 = vector.broadcast %44 : vector<1x128xf32> to vector<8x128xf32>
    %47 = arith.mulf %45, %46 : vector<8x128xf32>
    %48 = vector.broadcast %41 : vector<8x1xf32> to vector<8x128xf32>
    %49 = arith.addf %48, %47 : vector<8x128xf32>
    %50 = vector.extract_strided_slice %40 {offsets = [0, 1], sizes = [8, 1], strides = [1, 1]} : vector<8x4xf32> to vector<8x1xf32>
    %51 = vector.extract_strided_slice %0 {offsets = [1, 0], sizes = [1, 128], strides = [1, 1]} : vector<4x128xf32> to vector<1x128xf32>
    %52 = vector.broadcast %50 : vector<8x1xf32> to vector<8x128xf32>
    %53 = vector.broadcast %51 : vector<1x128xf32> to vector<8x128xf32>
    %54 = arith.mulf %52, %53 : vector<8x128xf32>
    %55 = arith.addf %49, %54 : vector<8x128xf32>
    %56 = vector.extract_strided_slice %40 {offsets = [0, 2], sizes = [8, 1], strides = [1, 1]} : vector<8x4xf32> to vector<8x1xf32>
    %57 = vector.extract_strided_slice %0 {offsets = [2, 0], sizes = [1, 128], strides = [1, 1]} : vector<4x128xf32> to vector<1x128xf32>
    %58 = vector.broadcast %56 : vector<8x1xf32> to vector<8x128xf32>
    %59 = vector.broadcast %57 : vector<1x128xf32> to vector<8x128xf32>
    %60 = arith.mulf %58, %59 : vector<8x128xf32>
    %61 = arith.addf %55, %60 : vector<8x128xf32>
    %62 = vector.extract_strided_slice %40 {offsets = [0, 3], sizes = [8, 1], strides = [1, 1]} : vector<8x4xf32> to vector<8x1xf32>
    %63 = vector.extract_strided_slice %0 {offsets = [3, 0], sizes = [1, 128], strides = [1, 1]} : vector<4x128xf32> to vector<1x128xf32>
    %64 = vector.broadcast %62 : vector<8x1xf32> to vector<8x128xf32>
    %65 = vector.broadcast %63 : vector<1x128xf32> to vector<8x128xf32>
    %66 = arith.mulf %64, %65 : vector<8x128xf32>
    %67 = arith.addf %61, %66 : vector<8x128xf32>
    %cst_4 = arith.constant 0.000000e+00 : f32
    %68 = vector.broadcast %cst_4 : f32 to vector<8x128xf32>
    %69 = arith.maximumf %67, %68 : vector<8x128xf32>
    %70 = vector.broadcast %42 : vector<8x1xf32> to vector<8x128xf32>
    %71 = arith.mulf %70, %69 : vector<8x128xf32>
    %cst_5 = arith.constant dense<0.000000e+00> : vector<128xf32>
    %72 = vector.multi_reduction <add>, %71, %cst_5 [0] : vector<8x128xf32> to vector<128xf32>
    %73 = vector.shape_cast %72 : vector<128xf32> to vector<1x128xf32>
    %74 = arith.addf %39, %73 : vector<1x128xf32>
    %75 = vector.extract_strided_slice %1 {offsets = [16, 0], sizes = [8, 4], strides = [1, 1]} : vector<24x8xf32> to vector<8x4xf32>
    %76 = vector.extract_strided_slice %1 {offsets = [16, 4], sizes = [8, 1], strides = [1, 1]} : vector<24x8xf32> to vector<8x1xf32>
    %77 = vector.extract_strided_slice %1 {offsets = [16, 5], sizes = [8, 1], strides = [1, 1]} : vector<24x8xf32> to vector<8x1xf32>
    %78 = vector.extract_strided_slice %75 {offsets = [0, 0], sizes = [8, 1], strides = [1, 1]} : vector<8x4xf32> to vector<8x1xf32>
    %79 = vector.extract_strided_slice %0 {offsets = [0, 0], sizes = [1, 128], strides = [1, 1]} : vector<4x128xf32> to vector<1x128xf32>
    %80 = vector.broadcast %78 : vector<8x1xf32> to vector<8x128xf32>
    %81 = vector.broadcast %79 : vector<1x128xf32> to vector<8x128xf32>
    %82 = arith.mulf %80, %81 : vector<8x128xf32>
    %83 = vector.broadcast %76 : vector<8x1xf32> to vector<8x128xf32>
    %84 = arith.addf %83, %82 : vector<8x128xf32>
    %85 = vector.extract_strided_slice %75 {offsets = [0, 1], sizes = [8, 1], strides = [1, 1]} : vector<8x4xf32> to vector<8x1xf32>
    %86 = vector.extract_strided_slice %0 {offsets = [1, 0], sizes = [1, 128], strides = [1, 1]} : vector<4x128xf32> to vector<1x128xf32>
    %87 = vector.broadcast %85 : vector<8x1xf32> to vector<8x128xf32>
    %88 = vector.broadcast %86 : vector<1x128xf32> to vector<8x128xf32>
    %89 = arith.mulf %87, %88 : vector<8x128xf32>
    %90 = arith.addf %84, %89 : vector<8x128xf32>
    %91 = vector.extract_strided_slice %75 {offsets = [0, 2], sizes = [8, 1], strides = [1, 1]} : vector<8x4xf32> to vector<8x1xf32>
    %92 = vector.extract_strided_slice %0 {offsets = [2, 0], sizes = [1, 128], strides = [1, 1]} : vector<4x128xf32> to vector<1x128xf32>
    %93 = vector.broadcast %91 : vector<8x1xf32> to vector<8x128xf32>
    %94 = vector.broadcast %92 : vector<1x128xf32> to vector<8x128xf32>
    %95 = arith.mulf %93, %94 : vector<8x128xf32>
    %96 = arith.addf %90, %95 : vector<8x128xf32>
    %97 = vector.extract_strided_slice %75 {offsets = [0, 3], sizes = [8, 1], strides = [1, 1]} : vector<8x4xf32> to vector<8x1xf32>
    %98 = vector.extract_strided_slice %0 {offsets = [3, 0], sizes = [1, 128], strides = [1, 1]} : vector<4x128xf32> to vector<1x128xf32>
    %99 = vector.broadcast %97 : vector<8x1xf32> to vector<8x128xf32>
    %100 = vector.broadcast %98 : vector<1x128xf32> to vector<8x128xf32>
    %101 = arith.mulf %99, %100 : vector<8x128xf32>
    %102 = arith.addf %96, %101 : vector<8x128xf32>
    %cst_6 = arith.constant 0.000000e+00 : f32
    %103 = vector.broadcast %cst_6 : f32 to vector<8x128xf32>
    %104 = arith.maximumf %102, %103 : vector<8x128xf32>
    %105 = vector.broadcast %77 : vector<8x1xf32> to vector<8x128xf32>
    %106 = arith.mulf %105, %104 : vector<8x128xf32>
    %cst_7 = arith.constant dense<0.000000e+00> : vector<128xf32>
    %107 = vector.multi_reduction <add>, %106, %cst_7 [0] : vector<8x128xf32> to vector<128xf32>
    %108 = vector.shape_cast %107 : vector<128xf32> to vector<1x128xf32>
    %109 = arith.addf %74, %108 : vector<1x128xf32>
    %110 = math.exp %109 : vector<1x128xf32>
    %cst_8 = arith.constant 1.000000e+00 : f32
    %111 = vector.broadcast %cst_8 : f32 to vector<1x128xf32>
    %112 = arith.addf %111, %110 : vector<1x128xf32>
    %cst_9 = arith.constant 1.000000e+00 : f32
    %113 = vector.broadcast %cst_9 : f32 to vector<1x128xf32>
    %114 = arith.divf %113, %112 : vector<1x128xf32>
    %cst_10 = arith.constant 1.000000e+00 : f32
    %115 = vector.broadcast %cst_10 : f32 to vector<1x128xf32>
    %116 = arith.subf %115, %114 : vector<1x128xf32>
    %117 = tpu.concatenate %114, %116 in 0 : vector<1x128xf32>, vector<1x128xf32> -> vector<2x128xf32>
    %c0_11 = arith.constant 0 : index
    %c0_12 = arith.constant 0 : index
    %118 = vector.load %arg2[%c0_11, %c0_12] : memref<2x128xf32, #tpu.memory_space<vmem>>, vector<2x128xf32>
    tpu.vector_store %arg2[%c0_11, %c0_12], %117 {strides = array<i32>} : memref<2x128xf32, #tpu.memory_space<vmem>>, vector<2x128xf32>,
    return
  }
}

</mosaic_0001>

<llo_original>
// kernel: policy_network_forward.1
$region0: #{policy_network_forward.1}
  #allocation0 [shape = 'u32[]', space=smem, size = 0x4, offset = 0x4, fixed_abs, tag = 'smem constant byte address 0x4 - core index']
  #allocation1 [shape = 'u32[144,128]{1,0:T(1,128)}', space=vmem, size = 0x12000, scoped, tag = 'internal scratch']
  %s0 = inlined_call_operand.vmem [shape: f32[4,128], index: 0, kind: input, shape index: {}]
  %s1 = inlined_call_operand.vmem [shape: f32[24,8], index: 1, kind: input, shape index: {}]
  %s2 = inlined_call_operand.vmem [shape: f32[2,128], index: 2, kind: output, shape index: {}]
  %s3 = sld [smem:[#allocation0]]
  $region18: #{policy_network_forward.1} parent=0
    _
  %s5 = ssub.s32 1, %s3
  %s6 = scalar_select 0, %s5, %s3
  // Predicated region
  $region2: #{policy_network_forward.1} parent=0 // pred_check
    _
  $region3: #{policy_network_forward.1} parent=0 // pred_check_branch
    %8 = sbr.rel (0) target = $region5
  $region4: #{policy_network_forward.1} parent=0 // pred_region
    _
  $region5: #{policy_network_forward.1} parent=0 // pred_fallthru
    _
  // Predicated region
  $region6: #{policy_network_forward.1} parent=0 // pred_check
    _
  $region7: #{policy_network_forward.1} parent=0 // pred_check_branch
    %10 = sbr.rel (0) target = $region9
  $region8: #{policy_network_forward.1} parent=0 // pred_region
    _
  $region9: #{policy_network_forward.1} parent=0 // pred_fallthru
    _
  %v11 = vld [vmem:[%s0] sm:$0xf]
  %v12 = vld [vmem:[%s1] sm:$0xff]
  %v13 = vld [vmem:[%s1 + $0x8] sm:$0xff]
  %v14 = vld [vmem:[%s1 + $0x10] sm:$0xff]
  %16 = vset.pattern.permute.xlu0 6
  %17 = vperm.xlu0 %16, %v12
  %v18 = vpop.permute.xlu0 %17
  %20 = vset.pattern.permute.xlu0 0
  %21 = vperm.xlu0 %20, %v12
  %v22 = vpop.permute.xlu0 %21
  %v24 = vlaneseq
  %v25 = vshrl.u32 %v24, 7
  %v26 = vsub.s32 0, %v25
  %v27 = vrot.slane %v11, %v26
  %v28 = vmul.f32 %v22, %v27
  %29 = vset.pattern.permute.xlu0 4
  %30 = vperm.xlu0 %29, %v12
  %v31 = vpop.permute.xlu0 %30
  %v33 = vadd.f32 %v31, %v28
  %34 = vset.pattern.permute.xlu0 1
  %35 = vperm.xlu0 %34, %v12
  %v36 = vpop.permute.xlu0 %35
  %v38 = vlaneseq
  %v39 = vshrl.u32 %v38, 7
  %v40 = vsub.s32 1, %v39
  %v41 = vrot.slane %v11, %v40
  %v42 = vmul.f32 %v36, %v41
  %v43 = vadd.f32 %v33, %v42
  %44 = vset.pattern.permute.xlu0 2
  %45 = vperm.xlu0 %44, %v12
  %v46 = vpop.permute.xlu0 %45
  %v48 = vlaneseq
  %v49 = vshrl.u32 %v48, 7
  %v50 = vsub.s32 2, %v49
  %v51 = vrot.slane %v11, %v50
  %v52 = vmul.f32 %v46, %v51
  %v53 = vadd.f32 %v43, %v52
  %54 = vset.pattern.permute.xlu0 3
  %55 = vperm.xlu0 %54, %v12
  %v56 = vpop.permute.xlu0 %55
  %v58 = vlaneseq
  %v59 = vshrl.u32 %v58, 7
  %v60 = vsub.s32 3, %v59
  %v61 = vrot.slane %v11, %v60
  %v62 = vmul.f32 %v56, %v61
  %v63 = vadd.f32 %v53, %v62
  %v64 = vmax.f32 %v63, 0.0
  %65 = vset.pattern.permute.xlu0 5
  %66 = vperm.xlu0 %65, %v12
  %v67 = vpop.permute.xlu0 %66
  %v69 = vmul.f32 %v67, %v64
  %v70 = vrot.slane %v69, 4
  %v71 = vadd.f32 %v69, %v70
  %v72 = vrot.slane %v71, 2
  %v73 = vadd.f32 %v71, %v72
  %v74 = vrot.slane %v73, 1
  %v75 = vadd.f32 %v73, %v74
  %v76 = vadd.f32 %v18, %v75
  %78 = vset.pattern.permute.xlu0 0
  %79 = vperm.xlu0 %78, %v13
  %v80 = vpop.permute.xlu0 %79
  %v82 = vmul.f32 %v80, %v27
  %83 = vset.pattern.permute.xlu0 4
  %84 = vperm.xlu0 %83, %v13
  %v85 = vpop.permute.xlu0 %84
  %v87 = vadd.f32 %v85, %v82
  %88 = vset.pattern.permute.xlu0 1
  %89 = vperm.xlu0 %88, %v13
  %v90 = vpop.permute.xlu0 %89
  %v92 = vmul.f32 %v90, %v41
  %v93 = vadd.f32 %v87, %v92
  %94 = vset.pattern.permute.xlu0 2
  %95 = vperm.xlu0 %94, %v13
  %v96 = vpop.permute.xlu0 %95
  %v98 = vmul.f32 %v96, %v51
  %v99 = vadd.f32 %v93, %v98
  %100 = vset.pattern.permute.xlu0 3
  %101 = vperm.xlu0 %100, %v13
  %v102 = vpop.permute.xlu0 %101
  %v104 = vmul.f32 %v102, %v61
  %v105 = vadd.f32 %v99, %v104
  %v106 = vmax.f32 %v105, 0.0
  %107 = vset.pattern.permute.xlu0 5
  %108 = vperm.xlu0 %107, %v13
  %v109 = vpop.permute.xlu0 %108
  %v111 = vmul.f32 %v109, %v106
  %v112 = vrot.slane %v111, 4
  %v113 = vadd.f32 %v111, %v112
  %v114 = vrot.slane %v113, 2
  %v115 = vadd.f32 %v113, %v114
  %v116 = vrot.slane %v115, 1
  %v117 = vadd.f32 %v115, %v116
  %v118 = vadd.f32 %v76, %v117
  %120 = vset.pattern.permute.xlu0 0
  %121 = vperm.xlu0 %120, %v14
  %v122 = vpop.permute.xlu0 %121
  %v124 = vmul.f32 %v122, %v27
  %125 = vset.pattern.permute.xlu0 4
  %126 = vperm.xlu0 %125, %v14
  %v127 = vpop.permute.xlu0 %126
  %v129 = vadd.f32 %v127, %v124
  %130 = vset.pattern.permute.xlu0 1
  %131 = vperm.xlu0 %130, %v14
  %v132 = vpop.permute.xlu0 %131
  %v134 = vmul.f32 %v132, %v41
  %v135 = vadd.f32 %v129, %v134
  %136 = vset.pattern.permute.xlu0 2
  %137 = vperm.xlu0 %136, %v14
  %v138 = vpop.permute.xlu0 %137
  %v140 = vmul.f32 %v138, %v51
  %v141 = vadd.f32 %v135, %v140
  %142 = vset.pattern.permute.xlu0 3
  %143 = vperm.xlu0 %142, %v14
  %v144 = vpop.permute.xlu0 %143
  %v146 = vmul.f32 %v144, %v61
  %v147 = vadd.f32 %v141, %v146
  %v148 = vmax.f32 %v147, 0.0
  %149 = vset.pattern.permute.xlu0 5
  %150 = vperm.xlu0 %149, %v14
  %v151 = vpop.permute.xlu0 %150
  %v153 = vmul.f32 %v151, %v148
  %v154 = vrot.slane %v153, 4
  %v155 = vadd.f32 %v153, %v154
  %v156 = vrot.slane %v155, 2
  %v157 = vadd.f32 %v155, %v156
  %v158 = vrot.slane %v157, 1
  %v159 = vadd.f32 %v157, %v158
  %v160 = vadd.f32 %v118, %v159
  %v161 = vmul.f32 %v160, 1.442695
  %v162 = vpow.pop %v161
  %v163 = vadd.f32 %v162, 1.0
  %v164 = vrcp.pop %v163
  %v165 = vmul.f32 1.0, %v164
  %v166 = vsub.f32 1.0, %v165
  %v168 = vrot.slane %v166, 7
  %vm170 = vcmask 1040384
  %v171 = vsel %vm170, %v165, %v168
  %172 = vst [vmem:[%s2] sm:$0x3] %v171
  // Predicated region
  $region10: #{policy_network_forward.1} parent=0 // pred_check
    _
  $region11: #{policy_network_forward.1} parent=0 // pred_check_branch
    %174 = sbr.rel (0) target = $region13
  $region12: #{policy_network_forward.1} parent=0 // pred_region
    _
  $region13: #{policy_network_forward.1} parent=0 // pred_fallthru
    _
  // Predicated region
  $region14: #{policy_network_forward.1} parent=0 // pred_check
    _
  $region15: #{policy_network_forward.1} parent=0 // pred_check_branch
    %176 = sbr.rel (0) target = $region17
  $region16: #{policy_network_forward.1} parent=0 // pred_region
    _
  $region17: #{policy_network_forward.1} parent=0 // pred_fallthru
    _

</llo_original>
